<compile_context>
chip_gen: v5e
topology: v5e:2x2
jax: 0.10.0
libtpu: 0.0.40
codegen_flags: <defaults>
</compile_context>

<pallas_src>
import functools

import jax
import jax.numpy as jnp
from jax import lax
from jax.experimental import pallas as pl
from jax.experimental.pallas import tpu as pltpu


# dot_general dimension numbers: contract dim 0 of both operands ("transposed LHS").
_TN = (((0,), (0,)), ((), ()))


# ---------------------------------------------------------------------------
# Kernel 1: fused 1x1-conv projections, gridded over (batch, lane tiles of N).
# ---------------------------------------------------------------------------
def _proj_kernel(x_ref, y_ref, wqkv_ref, bqkv_ref, wm_ref, bm_ref,
                 q_ref, k_ref, v_ref, cm_ref, *, cq_p, c):
    # bf16 operands -> native MXU rate on all generations; f32 accumulation;
    # bias added in f32; results stored bf16 for the attention matmuls.
    xb = x_ref[0].astype(jnp.bfloat16)                                   # (C, TP)
    yb = y_ref[0].astype(jnp.bfloat16)                                   # (8, TP)
    qkv = jnp.dot(wqkv_ref[...], xb,
                  preferred_element_type=jnp.float32) + bqkv_ref[...]    # (2*Cq_p+C, TP)
    cm = jnp.dot(wm_ref[...], yb,
                 preferred_element_type=jnp.float32) + bm_ref[...]       # (Cm_p, TP)
    q_ref[0] = qkv[0:cq_p].astype(q_ref.dtype)
    k_ref[0] = qkv[cq_p:2 * cq_p].astype(k_ref.dtype)
    v_ref[0] = qkv[2 * cq_p:2 * cq_p + c].astype(v_ref.dtype)
    cm_ref[0] = cm.astype(cm_ref.dtype)


# ---------------------------------------------------------------------------
# Kernel 2: tiled SASA attention, grid = (batch, output-pixel tiles, N slabs).
# ---------------------------------------------------------------------------
def _attn_kernel(params_ref,           # SMEM (2,): [0.5*mean_self, 0.5*mean_aff]
                 q_ref,                # (1, Cq_p, TI)   bf16  (0.5-scaled) query, this tile
                 k_ref,                # (1, Cq_p, SLAB) bf16  key, this slab
                 cmt_ref,              # (1, Cm_p, TI)   bf16  (sqrt(.5)-scaled) mask, this tile
                 cms_ref,              # (1, Cm_p, SLAB) bf16  mask, this slab
                 v_ref,                # (1, C, SLAB)    bf16  (0.25*gamma-scaled) value, slab
                 x_ref,                # (1, C, TI)      f32   residual input tile
                 out_ref):             # (1, C, TI)      f32   resident accumulator / output
    s = pl.program_id(2)

    @pl.when(s == 0)
    def _init():
        out_ref[0] = x_ref[0]          # start the accumulator at the residual

    # selfatten'^T[j, i] / affinity'^T[j, i] for slab rows j, tile columns i.
    # Channels (sublanes) are contracted on both operands so k / cm stay in
    # their lane-dense (C*, N) layout (no (N, 8) buffers, no XLA transposes).
    sa = lax.dot_general(k_ref[0], q_ref[0], _TN,
                         preferred_element_type=jnp.float32)             # (SLAB, TI)
    aff = lax.dot_general(cms_ref[0], cmt_ref[0], _TN,
                          preferred_element_type=jnp.float32)            # (SLAB, TI)

    # sigmoid(a)*sigmoid(b) == 0.25*(1+tanh(a/2))*(1+tanh(b/2)).  The 1/2
    # scales are folded into wq / wm and the 0.25*gamma into wv by the
    # wrapper, so per element this is just 2 EUP tanh + a VPU multiply.
    # TODO(synk): on v6e/v7x a bf16 tanh would double EUP throughput; kept f32
    # so the same code is exact/safe on v5e.
    p = ((1.0 + jnp.tanh(sa - params_ref[0])) *
         (1.0 + jnp.tanh(aff - params_ref[1]))).astype(jnp.bfloat16)     # (SLAB, TI)

    # out[:, tile] += (0.25*gamma*value)[:, slab] @ p
    out_ref[0] += jnp.dot(v_ref[0], p, preferred_element_type=jnp.float32)


# ---------------------------------------------------------------------------
# Host-side helpers / wrapper.
# ---------------------------------------------------------------------------
def structure_encoder(paf_mag, target_h, target_w):
    """Matches SASA.structure_encoder (F.interpolate mode='area', divisible sizes)."""
    torso = jnp.clip(jnp.sum(paf_mag[:, 1:3], axis=1, keepdims=True), 0.0, 1.0)
    arms = jnp.clip(jnp.sum(paf_mag[:, 4:8], axis=1, keepdims=True), 0.0, 1.0)
    legs = jnp.clip(jnp.sum(paf_mag[:, 8:12], axis=1, keepdims=True), 0.0, 1.0)
    fg = paf_mag[:, 12:13]
    bg = 1.0 - fg
    Y = jnp.concatenate([arms, torso, legs, fg, bg], axis=1)            # (B, 5, Hin, Win)
    B, C5, Hin, Win = Y.shape
    # TODO(synk): area interpolation only implemented for integer downscale factors.
    assert Hin % target_h == 0 and Win % target_w == 0, "area interpolate needs divisible sizes"
    fh, fw = Hin // target_h, Win // target_w
    return Y.reshape(B, C5, target_h, fh, target_w, fw).mean(axis=(3, 5))


def _round_up(x, m):
    return ((x + m - 1) // m) * m


def _pad_conv(w, b, rows, cols=None):
    """Zero-pad a (Cout, Cin) 1x1-conv weight/bias; padded channels stay exactly 0."""
    cout, cin = w.shape
    cols = cin if cols is None else cols
    wp = jnp.zeros((rows, cols), w.dtype).at[:cout, :cin].set(w)
    bp = jnp.zeros((rows, 1), b.dtype).at[:cout, 0].set(b)
    return wp, bp


def _pick_tile(n):
    for t in (512, 256, 128):
        if n % t == 0:
            return t
    # TODO(synk): H*W not a multiple of 128 falls back to one full-width block
    # (correct but untiled / lane-padded); pad the spatial dims upstream for perf.
    return n


def sasa_forward(X, PAF_mag, params):
    """params = dict(wq, bq, wk, bk, wv, bv, wm, bm, gamma); conv weights as (Cout, Cin)."""
    B, C, H, W = X.shape
    N = H * W
    assert C % 8 == 0, "in_dim must be a multiple of 8"

    wq, bq = params["wq"], params["bq"]
    wk, bk = params["wk"], params["bk"]
    wv, bv = params["wv"], params["bv"]
    wm, bm = params["wm"], params["bm"]
    gamma = params["gamma"]

    Y = structure_encoder(PAF_mag, H, W)                    # (B, 5, H, W)
    Xf = X.reshape(B, C, N).astype(jnp.float32)
    Yf = Y.reshape(B, 5, N).astype(jnp.float32)
    Yf8 = jnp.pad(Yf, ((0, 0), (0, 3), (0, 0)))             # 5 -> 8 mag-conv input channels

    # Fold the sigmoid 1/2 scales into wq / wm and 0.25*gamma into wv so the
    # hot kernel needs no extra full-width VPU scaling passes.
    wq_s, bq_s = 0.5 * wq, 0.5 * bq
    r2 = jnp.sqrt(jnp.float32(0.5))
    wm_s, bm_s = r2 * wm, r2 * bm
    gv = 0.25 * gamma
    wv_s, bv_s = gv * wv, gv * bv

    # Global means of the NxN maps (torch.mean over the whole (B, N, N) tensor)
    # from channel column sums: sum_ij (A^T B)_ij = sum_c (sum_i A_ci)(sum_j B_cj).
    xsum = Xf.sum(axis=2)                                   # (B, C)
    ysum = Yf.sum(axis=2)                                   # (B, 5)
    qsum = xsum @ wq_s.T + N * bq_s                         # (B, Cq)   (0.5-scaled)
    ksum = xsum @ wk.T + N * bk                             # (B, Cq)
    cmsum = ysum @ wm_s.T + N * bm_s                        # (B, Cm)   (sqrt(.5)-scaled)
    denom = jnp.float32(B * N * N)
    half_mean_self = jnp.sum(qsum * ksum) / denom           # = 0.5 * mean(selfatten)
    half_mean_aff = jnp.sum(cmsum * cmsum) / denom          # = 0.5 * mean(affinity)
    params_vec = jnp.stack([half_mean_self, half_mean_aff]).astype(jnp.float32)

    # Pad projection channel counts to 16 (native bf16 sublane tile) and stack
    # the three X-driven convs into a single matmul.
    Cq_p = _round_up(max(wq.shape[0], 1), 16)
    Cm_p = _round_up(max(wm.shape[0], 1), 16)
    wq_p, bq_p = _pad_conv(wq_s, bq_s, Cq_p)
    wk_p, bk_p = _pad_conv(wk, bk, Cq_p)
    wv_p, bv_p = _pad_conv(wv_s, bv_s, C)
    wm_p, bm_p = _pad_conv(wm_s, bm_s, Cm_p, cols=8)
    Ct = 2 * Cq_p + C
    wqkv = jnp.concatenate([wq_p, wk_p, wv_p], axis=0).astype(jnp.bfloat16)   # (Ct, C)
    bqkv = jnp.concatenate([bq_p, bk_p, bv_p], axis=0)                        # (Ct, 1) f32
    wm_b = wm_p.astype(jnp.bfloat16)

    # ---------------- projection pass (grid over batch x lane tiles) --------
    TP = _pick_tile(N)
    q, k, v, cm = pl.pallas_call(
        functools.partial(_proj_kernel, cq_p=Cq_p, c=C),
        out_shape=(
            jax.ShapeDtypeStruct((B, Cq_p, N), jnp.bfloat16),   # q  (0.5-scaled)
            jax.ShapeDtypeStruct((B, Cq_p, N), jnp.bfloat16),   # k
            jax.ShapeDtypeStruct((B, C, N), jnp.bfloat16),      # v  (0.25*gamma-scaled)
            jax.ShapeDtypeStruct((B, Cm_p, N), jnp.bfloat16),   # cm (sqrt(.5)-scaled)
        ),
        grid=(B, N // TP),
        in_specs=[
            pl.BlockSpec((1, C, TP), lambda b, p: (b, 0, p)),   # X tile
            pl.BlockSpec((1, 8, TP), lambda b, p: (b, 0, p)),   # Y tile (padded to 8 ch)
            pl.BlockSpec((Ct, C), lambda b, p: (0, 0)),         # stacked q/k/v weights
            pl.BlockSpec((Ct, 1), lambda b, p: (0, 0)),         # stacked biases (f32)
            pl.BlockSpec((Cm_p, 8), lambda b, p: (0, 0)),       # mag conv weight
            pl.BlockSpec((Cm_p, 1), lambda b, p: (0, 0)),       # mag conv bias (f32)
        ],
        out_specs=(
            pl.BlockSpec((1, Cq_p, TP), lambda b, p: (b, 0, p)),
            pl.BlockSpec((1, Cq_p, TP), lambda b, p: (b, 0, p)),
            pl.BlockSpec((1, C, TP), lambda b, p: (b, 0, p)),
            pl.BlockSpec((1, Cm_p, TP), lambda b, p: (b, 0, p)),
        ),
        compiler_params=pltpu.CompilerParams(
            dimension_semantics=("parallel", "parallel")),
    )(Xf, Yf8, wqkv, bqkv, wm_b, bm_p)

    # ---------------- attention pass (grid over batch x tiles x N-slabs) ----
    TI = _pick_tile(N)      # output lane tile (columns i)
    SLAB = _pick_tile(N)    # reduction slab   (rows j); temps are O(SLAB*TI)
    NT, NS = N // TI, N // SLAB

    flops = 2 * B * N * N * (Cq_p + Cm_p + C)
    bytes_accessed = (B * NT * N * 2 * (Cq_p + Cm_p + C)    # k / cm / v streamed per tile (bf16)
                      + B * N * 2 * (Cq_p + Cm_p)           # q / cm tile reads (bf16)
                      + 2 * B * C * N * 4)                  # f32 residual read + output write
    cost = pl.CostEstimate(flops=int(flops),
                           transcendentals=int(2 * B * N * N),
                           bytes_accessed=int(bytes_accessed))

    # VMEM note: per step we hold double-buffered blocks (<1 MiB) plus a few
    # O(SLAB*TI) f32 temporaries (~4-6 MiB) -> comfortably under the default
    # 32 MiB scoped limit on every generation, so no vmem_limit override.
    out_flat = pl.pallas_call(
        _attn_kernel,
        out_shape=jax.ShapeDtypeStruct((B, C, N), jnp.float32),
        grid=(B, NT, NS),
        in_specs=[
            pl.BlockSpec(memory_space=pltpu.MemorySpace.SMEM),          # scalar params
            pl.BlockSpec((1, Cq_p, TI), lambda b, t, s: (b, 0, t)),     # q tile (resident over s)
            pl.BlockSpec((1, Cq_p, SLAB), lambda b, t, s: (b, 0, s)),   # k slab (streamed)
            pl.BlockSpec((1, Cm_p, TI), lambda b, t, s: (b, 0, t)),     # cm tile
            pl.BlockSpec((1, Cm_p, SLAB), lambda b, t, s: (b, 0, s)),   # cm slab
            pl.BlockSpec((1, C, SLAB), lambda b, t, s: (b, 0, s)),      # v slab
            pl.BlockSpec((1, C, TI), lambda b, t, s: (b, 0, t)),        # residual X tile
        ],
        out_specs=pl.BlockSpec((1, C, TI), lambda b, t, s: (b, 0, t)),
        compiler_params=pltpu.CompilerParams(
            dimension_semantics=("parallel", "parallel", "arbitrary")),
        cost_estimate=cost,
    )(params_vec, q, k, cm, cm, v, Xf)

    return out_flat.reshape(B, C, H, W), Y


def sasa_reference(X, PAF_mag, params):
    """Pure-JAX f32 reference mirroring the torch forward (for a sanity check)."""
    B, C, H, W = X.shape
    N = H * W
    Y = structure_encoder(PAF_mag, H, W)
    Xf = X.reshape(B, C, N).astype(jnp.float32)
    Yf = Y.reshape(B, 5, N).astype(jnp.float32)

    def conv1x1(w, b, x):
        return jnp.einsum('oc,bcn->bon', w, x) + b[None, :, None]

    cm = conv1x1(params["wm"], params["bm"], Yf)
    aff = jnp.einsum('bci,bcj->bij', cm, cm)
    aff = jax.nn.sigmoid(aff - jnp.mean(aff))
    q = conv1x1(params["wq"], params["bq"], Xf)
    k = conv1x1(params["wk"], params["bk"], Xf)
    sa = jnp.einsum('bci,bcj->bij', q, k)
    sa = jax.nn.sigmoid(sa - jnp.mean(sa))
    sasa = sa * aff
    v = conv1x1(params["wv"], params["bv"], Xf)
    out = jnp.einsum('bcj,bij->bci', v, sasa)
    out = params["gamma"] * out + Xf
    return out.reshape(B, C, H, W), Y


def init_params(key, in_dim):
    """Deterministic synthetic init mirroring SASA.__init__ shapes (kernel_size=1 convs)."""
    ks = jax.random.split(key, 8)

    def conv(kw, kb, cout, cin):
        bound = 1.0 / jnp.sqrt(jnp.float32(cin))
        w = jax.random.uniform(kw, (cout, cin), jnp.float32, -bound, bound)
        b = jax.random.uniform(kb, (cout,), jnp.float32, -bound, bound)
        return w, b

    wq, bq = conv(ks[0], ks[1], in_dim // 8, in_dim)
    wk, bk = conv(ks[2], ks[3], in_dim // 8, in_dim)
    wv, bv = conv(ks[4], ks[5], in_dim, in_dim)
    wm, bm = conv(ks[6], ks[7], in_dim // 32, 5)
    # The module inits gamma to zero; use a nonzero value here so the demo
    # actually exercises the attention path (gamma=0 reduces out to X).
    gamma = jnp.float32(0.5)
    return dict(wq=wq, bq=bq, wk=wk, bk=bk, wv=wv, bv=bv, wm=wm, bm=bm, gamma=gamma)


if __name__ == "__main__":
    key = jax.random.PRNGKey(0)
    k_x, k_paf, k_p = jax.random.split(key, 3)

    B, C, H, W = 2, 32, 16, 32          # in_dim=32 -> Cq=4, Cm=1 ; N=512
    Hp, Wp = 32, 64                     # PAF maps, area-interpolated down to (H, W)

    X = jax.random.normal(k_x, (B, C, H, W), jnp.float32)
    PAF_mag = jax.random.uniform(k_paf, (B, 13, Hp, Wp), jnp.float32)
    params = init_params(k_p, C)

    out, Y = sasa_forward(X, PAF_mag, params)
    jax.block_until_ready(out)
    jax.block_until_ready(Y)

    assert out.shape == (B, C, H, W) and Y.shape == (B, 5, H, W)
    assert bool(jnp.all(jnp.isfinite(out)))

    # Loose sanity check vs the pure-JAX f32 reference (kernel uses bf16 MXU ops).
    ref_out, _ = sasa_reference(X, PAF_mag, params)
    err = float(jnp.max(jnp.abs(out - ref_out)))
    scale = float(jnp.max(jnp.abs(ref_out))) + 1.0
    assert err <= 5e-2 * scale, f"kernel/reference mismatch: max err {err} (scale {scale})"

    print("KERNEL_OK")
</pallas_src>

<mosaic_0001>
module attributes {stable_mosaic.version = 11 : i64} {
  func.func @_proj_kernel(%arg0: i32, %arg1: i32, %arg2: memref<1x32x512xf32, #tpu.memory_space<vmem>>, %arg3: memref<1x8x512xf32, #tpu.memory_space<vmem>>, %arg4: memref<64x32xbf16, #tpu.memory_space<vmem>>, %arg5: memref<64x1xf32, #tpu.memory_space<vmem>>, %arg6: memref<16x8xbf16, #tpu.memory_space<vmem>>, %arg7: memref<16x1xf32, #tpu.memory_space<vmem>>, %arg8: memref<1x16x512xbf16, #tpu.memory_space<vmem>>, %arg9: memref<1x16x512xbf16, #tpu.memory_space<vmem>>, %arg10: memref<1x32x512xbf16, #tpu.memory_space<vmem>>, %arg11: memref<1x16x512xbf16, #tpu.memory_space<vmem>>) attributes {dimension_semantics = [#tpu.dimension_semantics<parallel>, #tpu.dimension_semantics<parallel>], iteration_bounds = array<i64: 2, 1>, scalar_prefetch = 0 : i64, scratch_operands = 0 : i64, tpu.core_type = #tpu.core_type<tc>, window_params = [{transform_indices = @transform_0, window_bounds = array<i64: 1, 32, 512>}, {transform_indices = @transform_1, window_bounds = array<i64: 1, 8, 512>}, {pipeline_mode = #tpu.pipeline_mode<synchronous>, transform_indices = @transform_2, window_bounds = array<i64: 64, 32>}, {pipeline_mode = #tpu.pipeline_mode<synchronous>, transform_indices = @transform_3, window_bounds = array<i64: 64, 1>}, {pipeline_mode = #tpu.pipeline_mode<synchronous>, transform_indices = @transform_4, window_bounds = array<i64: 16, 8>}, {pipeline_mode = #tpu.pipeline_mode<synchronous>, transform_indices = @transform_5, window_bounds = array<i64: 16, 1>}, {transform_indices = @transform_6, window_bounds = array<i64: 1, 16, 512>}, {transform_indices = @transform_7, window_bounds = array<i64: 1, 16, 512>}, {transform_indices = @transform_8, window_bounds = array<i64: 1, 32, 512>}, {transform_indices = @transform_9, window_bounds = array<i64: 1, 16, 512>}]} {
    %c0 = arith.constant 0 : index
    %c0_0 = arith.constant 0 : index
    %c0_1 = arith.constant 0 : index
    %0 = vector.load %arg2[%c0, %c0_0, %c0_1] : memref<1x32x512xf32, #tpu.memory_space<vmem>>, vector<1x32x512xf32>
    %1 = vector.shape_cast %0 : vector<1x32x512xf32> to vector<32x512xf32>
    %2 = arith.truncf %1 : vector<32x512xf32> to vector<32x512xbf16>
    %c0_2 = arith.constant 0 : index
    %c0_3 = arith.constant 0 : index
    %c0_4 = arith.constant 0 : index
    %3 = vector.load %arg3[%c0_2, %c0_3, %c0_4] : memref<1x8x512xf32, #tpu.memory_space<vmem>>, vector<1x8x512xf32>
    %4 = vector.shape_cast %3 : vector<1x8x512xf32> to vector<8x512xf32>
    %5 = arith.truncf %4 : vector<8x512xf32> to vector<8x512xbf16>
    %c0_5 = arith.constant 0 : index
    %c0_6 = arith.constant 0 : index
    %6 = vector.load %arg4[%c0_5, %c0_6] : memref<64x32xbf16, #tpu.memory_space<vmem>>, vector<64x32xbf16>
    %cst = arith.constant dense<0.000000e+00> : vector<64x512xf32>
    %7 = tpu.matmul %6, %2, %cst {dimension_numbers = #tpu.dot_dimension_numbers<[1], [0], [0], [1], [0, 0, 1, 1], [], []>} : vector<64x32xbf16>, vector<32x512xbf16>, vector<64x512xf32> -> vector<64x512xf32>
    %c0_7 = arith.constant 0 : index
    %c0_8 = arith.constant 0 : index
    %8 = vector.load %arg5[%c0_7, %c0_8] : memref<64x1xf32, #tpu.memory_space<vmem>>, vector<64x1xf32>
    %9 = vector.broadcast %8 : vector<64x1xf32> to vector<64x512xf32>
    %10 = arith.addf %7, %9 : vector<64x512xf32>
    %c0_9 = arith.constant 0 : index
    %c0_10 = arith.constant 0 : index
    %11 = vector.load %arg6[%c0_9, %c0_10] : memref<16x8xbf16, #tpu.memory_space<vmem>>, vector<16x8xbf16>
    %cst_11 = arith.constant dense<0.000000e+00> : vector<16x512xf32>
    %12 = tpu.matmul %11, %5, %cst_11 {dimension_numbers = #tpu.dot_dimension_numbers<[1], [0], [0], [1], [0, 0, 1, 1], [], []>} : vector<16x8xbf16>, vector<8x512xbf16>, vector<16x512xf32> -> vector<16x512xf32>
    %c0_12 = arith.constant 0 : index
    %c0_13 = arith.constant 0 : index
    %13 = vector.load %arg7[%c0_12, %c0_13] : memref<16x1xf32, #tpu.memory_space<vmem>>, vector<16x1xf32>
    %14 = vector.broadcast %13 : vector<16x1xf32> to vector<16x512xf32>
    %15 = arith.addf %12, %14 : vector<16x512xf32>
    %16 = vector.extract_strided_slice %10 {offsets = [0, 0], sizes = [16, 512], strides = [1, 1]} : vector<64x512xf32> to vector<16x512xf32>
    %17 = arith.truncf %16 : vector<16x512xf32> to vector<16x512xbf16>
    %c0_14 = arith.constant 0 : index
    %c0_15 = arith.constant 0 : index
    %c0_16 = arith.constant 0 : index
    %18 = vector.load %arg8[%c0_14, %c0_15, %c0_16] : memref<1x16x512xbf16, #tpu.memory_space<vmem>>, vector<1x16x512xbf16>
    %19 = vector.shape_cast %18 : vector<1x16x512xbf16> to vector<16x512xbf16>
    %20 = vector.shape_cast %17 : vector<16x512xbf16> to vector<1x16x512xbf16>
    tpu.vector_store %arg8[%c0_14, %c0_15, %c0_16], %20 {strides = array<i32>} : memref<1x16x512xbf16, #tpu.memory_space<vmem>>, vector<1x16x512xbf16>,
    %21 = vector.extract_strided_slice %10 {offsets = [16, 0], sizes = [16, 512], strides = [1, 1]} : vector<64x512xf32> to vector<16x512xf32>
    %22 = arith.truncf %21 : vector<16x512xf32> to vector<16x512xbf16>
    %c0_17 = arith.constant 0 : index
    %c0_18 = arith.constant 0 : index
    %c0_19 = arith.constant 0 : index
    %23 = vector.load %arg9[%c0_17, %c0_18, %c0_19] : memref<1x16x512xbf16, #tpu.memory_space<vmem>>, vector<1x16x512xbf16>
    %24 = vector.shape_cast %23 : vector<1x16x512xbf16> to vector<16x512xbf16>
    %25 = vector.shape_cast %22 : vector<16x512xbf16> to vector<1x16x512xbf16>
    tpu.vector_store %arg9[%c0_17, %c0_18, %c0_19], %25 {strides = array<i32>} : memref<1x16x512xbf16, #tpu.memory_space<vmem>>, vector<1x16x512xbf16>,
    %26 = vector.extract_strided_slice %10 {offsets = [32, 0], sizes = [32, 512], strides = [1, 1]} : vector<64x512xf32> to vector<32x512xf32>
    %27 = arith.truncf %26 : vector<32x512xf32> to vector<32x512xbf16>
    %c0_20 = arith.constant 0 : index
    %c0_21 = arith.constant 0 : index
    %c0_22 = arith.constant 0 : index
    %28 = vector.load %arg10[%c0_20, %c0_21, %c0_22] : memref<1x32x512xbf16, #tpu.memory_space<vmem>>, vector<1x32x512xbf16>
    %29 = vector.shape_cast %28 : vector<1x32x512xbf16> to vector<32x512xbf16>
    %30 = vector.shape_cast %27 : vector<32x512xbf16> to vector<1x32x512xbf16>
    tpu.vector_store %arg10[%c0_20, %c0_21, %c0_22], %30 {strides = array<i32>} : memref<1x32x512xbf16, #tpu.memory_space<vmem>>, vector<1x32x512xbf16>,
    %31 = arith.truncf %15 : vector<16x512xf32> to vector<16x512xbf16>
    %c0_23 = arith.constant 0 : index
    %c0_24 = arith.constant 0 : index
    %c0_25 = arith.constant 0 : index
    %32 = vector.load %arg11[%c0_23, %c0_24, %c0_25] : memref<1x16x512xbf16, #tpu.memory_space<vmem>>, vector<1x16x512xbf16>
    %33 = vector.shape_cast %32 : vector<1x16x512xbf16> to vector<16x512xbf16>
    %34 = vector.shape_cast %31 : vector<16x512xbf16> to vector<1x16x512xbf16>
    tpu.vector_store %arg11[%c0_23, %c0_24, %c0_25], %34 {strides = array<i32>} : memref<1x16x512xbf16, #tpu.memory_space<vmem>>, vector<1x16x512xbf16>,
    return
  }
  func.func @transform_0(%arg0: i32, %arg1: i32) -> (i32, i32, i32) {
    %c0_i32 = arith.constant 0 : i32
    %c0_i32_0 = arith.constant 0 : i32
    return %arg0, %c0_i32, %arg1 : i32, i32, i32
  }
  func.func @transform_1(%arg0: i32, %arg1: i32) -> (i32, i32, i32) {
    %c0_i32 = arith.constant 0 : i32
    %c0_i32_0 = arith.constant 0 : i32
    return %arg0, %c0_i32, %arg1 : i32, i32, i32
  }
  func.func @transform_2(%arg0: i32, %arg1: i32) -> (i32, i32) {
    %c0_i32 = arith.constant 0 : i32
    %c0_i32_0 = arith.constant 0 : i32
    %c0_i32_1 = arith.constant 0 : i32
    return %c0_i32, %c0_i32_0 : i32, i32
  }
  func.func @transform_3(%arg0: i32, %arg1: i32) -> (i32, i32) {
    %c0_i32 = arith.constant 0 : i32
    %c0_i32_0 = arith.constant 0 : i32
    %c0_i32_1 = arith.constant 0 : i32
    return %c0_i32, %c0_i32_0 : i32, i32
  }
  func.func @transform_4(%arg0: i32, %arg1: i32) -> (i32, i32) {
    %c0_i32 = arith.constant 0 : i32
    %c0_i32_0 = arith.constant 0 : i32
    %c0_i32_1 = arith.constant 0 : i32
    return %c0_i32, %c0_i32_0 : i32, i32
  }
  func.func @transform_5(%arg0: i32, %arg1: i32) -> (i32, i32) {
    %c0_i32 = arith.constant 0 : i32
    %c0_i32_0 = arith.constant 0 : i32
    %c0_i32_1 = arith.constant 0 : i32
    return %c0_i32, %c0_i32_0 : i32, i32
  }
  func.func @transform_6(%arg0: i32, %arg1: i32) -> (i32, i32, i32) {
    %c0_i32 = arith.constant 0 : i32
    %c0_i32_0 = arith.constant 0 : i32
    return %arg0, %c0_i32, %arg1 : i32, i32, i32
  }
  func.func @transform_7(%arg0: i32, %arg1: i32) -> (i32, i32, i32) {
    %c0_i32 = arith.constant 0 : i32
    %c0_i32_0 = arith.constant 0 : i32
    return %arg0, %c0_i32, %arg1 : i32, i32, i32
  }
  func.func @transform_8(%arg0: i32, %arg1: i32) -> (i32, i32, i32) {
    %c0_i32 = arith.constant 0 : i32
    %c0_i32_0 = arith.constant 0 : i32
    return %arg0, %c0_i32, %arg1 : i32, i32, i32
  }
  func.func @transform_9(%arg0: i32, %arg1: i32) -> (i32, i32, i32) {
    %c0_i32 = arith.constant 0 : i32
    %c0_i32_0 = arith.constant 0 : i32
    return %arg0, %c0_i32, %arg1 : i32, i32, i32
  }
}

</mosaic_0001>

<llo_original>
// kernel: tpu_custom_call.1
$region0: #{tpu_custom_call.1}
  #allocation0 [shape = 'u32[]', space=smem, size = 0x4, offset = 0x4, fixed_abs, tag = 'smem constant byte address 0x4 - core index']
  #allocation1 [shape = 'u32[72,128]{1,0:T(1,128)}', space=vmem, size = 0x9000, scoped, tag = 'internal scratch']
  %s0 = inlined_call_operand.hbm [shape: f32[2,32,512], index: 0, kind: input, shape index: {}]
  %s1 = inlined_call_operand.vmem [shape: f32[2,8,512], index: 1, kind: input, shape index: {}]
  %s2 = inlined_call_operand.vmem [shape: bf16[64,32], index: 2, kind: input, shape index: {}]
  %s3 = inlined_call_operand.vmem [shape: f32[64,1], index: 3, kind: input, shape index: {}]
  %s4 = inlined_call_operand.vmem [shape: bf16[16,8], index: 4, kind: input, shape index: {}]
  %s5 = inlined_call_operand.vmem [shape: f32[16,1], index: 5, kind: input, shape index: {}]
  %s6 = inlined_call_operand.hbm [shape: bf16[2,16,512], index: 6, kind: output, shape index: {0}]
  %s7 = inlined_call_operand.hbm [shape: bf16[2,16,512], index: 7, kind: output, shape index: {1}]
  %s8 = inlined_call_operand.hbm [shape: bf16[2,32,512], index: 8, kind: output, shape index: {2}]
  %s9 = inlined_call_operand.hbm [shape: bf16[2,16,512], index: 9, kind: output, shape index: {3}]
  %10 = xla_tuple %s6, %s7, %s8, %s9
  %s11 = sld [smem:[#allocation0]]
  $region85: #{tpu_custom_call.1} parent=0
    _
  %s13 = ssub.s32 1, %s11
  %s14 = scalar_select 0, %s13, %s11
  $region1: #{tpu_custom_call.1} parent=0
    #allocation2 [shape = 'u8[131072]{0}', space=vmem, size = 0x20000, scoped, tag = 'input window, operand 0']
    #allocation3 [shape = 's32[2]{0}', space=sflag, size = 0x8, scoped, tag = 'scoped memory for tpu_custom_call.1']
    #allocation4 [shape = 's32[2]{0}', space=sflag, size = 0x8, scoped, tag = 'scoped memory for tpu_custom_call.1']
    #allocation5 [shape = 'u8[32768]{0}', space=vmem, size = 0x8000, scoped, tag = 'output window, operand 0']
    #allocation6 [shape = 'u8[32768]{0}', space=vmem, size = 0x8000, scoped, tag = 'output window, operand 1']
    #allocation7 [shape = 's32[2]{0}', space=sflag, size = 0x8, scoped, tag = 'scoped memory for tpu_custom_call.1']
    #allocation8 [shape = 'u8[65536]{0}', space=vmem, size = 0x10000, scoped, tag = 'output window, operand 2']
    #allocation9 [shape = 'u8[32768]{0}', space=vmem, size = 0x8000, scoped, tag = 'output window, operand 3']
    #allocation10 [shape = 's32[2]{0}', space=sflag, size = 0x8, scoped, tag = 'scoped memory for tpu_custom_call.1']
    %15 = vsyncpa [#allocation3], 0
    %s16 = scalar_lea.sflag [#allocation3], 1
    %17 = vsyncpa %s16, 0
    %18 = vsyncpa [#allocation4], 0
    %s19 = scalar_lea.sflag [#allocation4], 1
    %20 = vsyncpa %s19, 0
    %21 = vsyncpa [#allocation7], 0
    %s22 = scalar_lea.sflag [#allocation7], 1
    %23 = vsyncpa %s22, 0
    %24 = vsyncpa [#allocation10], 0
    %s25 = scalar_lea.sflag [#allocation10], 1
    %26 = vsyncpa %s25, 0
    loop: start=0, step=1, limit=4
    $region2: #{tpu_custom_call.1} parent=1 // loop_pre_header
      _
    $region3: #{tpu_custom_call.1} parent=1 // loop_header
      %s28 = sphi 0, %s32
      %p29 = scmp.ge.s32.totalorder %s28, 4
      %s35 = sphi 0, %s47
      %s36 = sphi 0, %s43
      %s37 = sphi 0, %s35
      %s38 = sphi 0, %s36
      %s39 = sphi 0, %s37
      %s40 = sphi 0, %s38
      %s52 = sphi 0, %s54
      %s55 = sphi 0, %s52
      %s56 = sphi 0, %s55
      %s72 = sphi 0, %s56
      %s80 = sphi 0, %s82
      %s83 = sphi 0, %s80
      %s84 = sphi 0, %s83
      %s100 = sphi 0, %s84
      %s104 = sphi 0, %s104
      %s106 = sphi 0, %s104
      %s107 = sphi 0, %s106
      %s121 = sphi 0, %s107
      %s125 = sphi 0, %s125
      %s127 = sphi 0, %s125
      %s128 = sphi 0, %s127
      %s142 = sphi 0, %s128
      %s146 = sphi 0, %s146
      %s148 = sphi 0, %s146
      %s149 = sphi 0, %s148
      %s163 = sphi 0, %s149
      %s167 = sphi 0, %s167
      %s169 = sphi 0, %s167
      %s170 = sphi 0, %s169
      %s184 = sphi 0, %s170
      %s192 = sphi 0, %s194
      %s195 = sphi 0, %s192
      %s196 = sphi 0, %s195
      %s212 = sphi 0, %s196
      %s220 = sphi 0, %s222
      %s223 = sphi 0, %s220
      %s224 = sphi 0, %s223
      %s240 = sphi 0, %s224
      %s248 = sphi 0, %s250
      %s251 = sphi 0, %s248
      %s252 = sphi 0, %s251
      %s268 = sphi 0, %s252
      %s276 = sphi 0, %s278
      %s279 = sphi 0, %s276
      %s280 = sphi 0, %s279
      %s296 = sphi 0, %s280
    $region4: #{tpu_custom_call.1} parent=1 // loop_header_branch
      %31 = sbr.rel (%p29) target = $region8
    $region5: #{tpu_custom_call.1} parent=1 // loop_body
      %s33 = ssub.s32 %s28, 1
      %s34 = ssub.s32 %s28, 2
      %s41 = sadd.s32 1, %s36
      %p42 = scmp.ge.s32.totalorder %s41, 1
      %s43 = scalar_select %p42, 0, %s41
      %s44 = sadd.s32 1, %s35
      %s45 = scalar_select %p42, %s44, %s35
      %p46 = scmp.ge.s32.totalorder %s45, 2
      %s47 = scalar_select %p46, 0, %s45
      %s48 = ssub.s32 %s35, %s47
      %s49 = ssub.s32 %s36, %s43
      %s50 = sor.u32 %s48, %s49
      %p51 = scmp.eq.s32.totalorder %s50, 0
      %s53 = sadd.s32 %s52, 1
      %s54 = scalar_select %p51, %s52, %s53
      %p57 = pneg %p51
      %p58 = scmp.eq.s32.totalorder %s28, 1
      %p59 = por %p57, %p58
      %p60 = scmp.ne.s32.totalorder %s52, %s55
      %p61 = scmp.eq.s32.totalorder %s28, 0
      %p62 = por %p60, %p61
      %p63 = scmp.ne.s32.totalorder %s52, %s55
      %p64 = scmp.eq.s32.totalorder %s33, 1
      %p65 = por %p63, %p64
      %p66 = scmp.ne.s32.totalorder %s55, %s56
      %p67 = scmp.eq.s32.totalorder %s33, 0
      %p68 = por %p66, %p67
      %p69 = scmp.ne.s32.totalorder %s55, %s56
      %p70 = scmp.eq.s32.totalorder %s34, 1
      %p71 = por %p69, %p70
      %p73 = scmp.ne.s32.totalorder %s56, %s72
      %p74 = scmp.eq.s32.totalorder %s34, 0
      %p75 = por %p73, %p74
      %s76 = ssub.s32 %s35, %s47
      %s77 = ssub.s32 %s36, %s43
      %s78 = sor.u32 %s76, %s77
      %p79 = scmp.eq.s32.totalorder %s78, 0
      %s81 = sadd.s32 %s80, 1
      %s82 = scalar_select %p79, %s80, %s81
      %p85 = pneg %p79
      %p86 = scmp.eq.s32.totalorder %s28, 1
      %p87 = por %p85, %p86
      %p88 = scmp.ne.s32.totalorder %s80, %s83
      %p89 = scmp.eq.s32.totalorder %s28, 0
      %p90 = por %p88, %p89
      %p91 = scmp.ne.s32.totalorder %s80, %s83
      %p92 = scmp.eq.s32.totalorder %s33, 1
      %p93 = por %p91, %p92
      %p94 = scmp.ne.s32.totalorder %s83, %s84
      %p95 = scmp.eq.s32.totalorder %s33, 0
      %p96 = por %p94, %p95
      %p97 = scmp.ne.s32.totalorder %s83, %s84
      %p98 = scmp.eq.s32.totalorder %s34, 1
      %p99 = por %p97, %p98
      %p101 = scmp.ne.s32.totalorder %s84, %s100
      %p102 = scmp.eq.s32.totalorder %s34, 0
      %p103 = por %p101, %p102
      %s105 = sadd.s32 %s104, 1
      %p108 = scmp.eq.s32.totalorder %s28, 1
      %p109 = scmp.ne.s32.totalorder %s104, %s106
      %p110 = scmp.eq.s32.totalorder %s28, 0
      %p111 = por %p109, %p110
      %p112 = scmp.ne.s32.totalorder %s104, %s106
      %p113 = scmp.eq.s32.totalorder %s33, 1
      %p114 = por %p112, %p113
      %p115 = scmp.ne.s32.totalorder %s106, %s107
      %p116 = scmp.eq.s32.totalorder %s33, 0
      %p117 = por %p115, %p116
      %p118 = scmp.ne.s32.totalorder %s106, %s107
      %p119 = scmp.eq.s32.totalorder %s34, 1
      %p120 = por %p118, %p119
      %p122 = scmp.ne.s32.totalorder %s107, %s121
      %p123 = scmp.eq.s32.totalorder %s34, 0
      %p124 = por %p122, %p123
      %s126 = sadd.s32 %s125, 1
      %p129 = scmp.eq.s32.totalorder %s28, 1
      %p130 = scmp.ne.s32.totalorder %s125, %s127
      %p131 = scmp.eq.s32.totalorder %s28, 0
      %p132 = por %p130, %p131
      %p133 = scmp.ne.s32.totalorder %s125, %s127
      %p134 = scmp.eq.s32.totalorder %s33, 1
      %p135 = por %p133, %p134
      %p136 = scmp.ne.s32.totalorder %s127, %s128
      %p137 = scmp.eq.s32.totalorder %s33, 0
      %p138 = por %p136, %p137
      %p139 = scmp.ne.s32.totalorder %s127, %s128
      %p140 = scmp.eq.s32.totalorder %s34, 1
      %p141 = por %p139, %p140
      %p143 = scmp.ne.s32.totalorder %s128, %s142
      %p144 = scmp.eq.s32.totalorder %s34, 0
      %p145 = por %p143, %p144
      %s147 = sadd.s32 %s146, 1
      %p150 = scmp.eq.s32.totalorder %s28, 1
      %p151 = scmp.ne.s32.totalorder %s146, %s148
      %p152 = scmp.eq.s32.totalorder %s28, 0
      %p153 = por %p151, %p152
      %p154 = scmp.ne.s32.totalorder %s146, %s148
      %p155 = scmp.eq.s32.totalorder %s33, 1
      %p156 = por %p154, %p155
      %p157 = scmp.ne.s32.totalorder %s148, %s149
      %p158 = scmp.eq.s32.totalorder %s33, 0
      %p159 = por %p157, %p158
      %p160 = scmp.ne.s32.totalorder %s148, %s149
      %p161 = scmp.eq.s32.totalorder %s34, 1
      %p162 = por %p160, %p161
      %p164 = scmp.ne.s32.totalorder %s149, %s163
      %p165 = scmp.eq.s32.totalorder %s34, 0
      %p166 = por %p164, %p165
      %s168 = sadd.s32 %s167, 1
      %p171 = scmp.eq.s32.totalorder %s28, 1
      %p172 = scmp.ne.s32.totalorder %s167, %s169
      %p173 = scmp.eq.s32.totalorder %s28, 0
      %p174 = por %p172, %p173
      %p175 = scmp.ne.s32.totalorder %s167, %s169
      %p176 = scmp.eq.s32.totalorder %s33, 1
      %p177 = por %p175, %p176
      %p178 = scmp.ne.s32.totalorder %s169, %s170
      %p179 = scmp.eq.s32.totalorder %s33, 0
      %p180 = por %p178, %p179
      %p181 = scmp.ne.s32.totalorder %s169, %s170
      %p182 = scmp.eq.s32.totalorder %s34, 1
      %p183 = por %p181, %p182
      %p185 = scmp.ne.s32.totalorder %s170, %s184
      %p186 = scmp.eq.s32.totalorder %s34, 0
      %p187 = por %p185, %p186
      %s188 = ssub.s32 %s35, %s47
      %s189 = ssub.s32 %s36, %s43
      %s190 = sor.u32 %s188, %s189
      %p191 = scmp.eq.s32.totalorder %s190, 0
      %s193 = sadd.s32 %s192, 1
      %s194 = scalar_select %p191, %s192, %s193
      %p197 = pneg %p191
      %p198 = scmp.eq.s32.totalorder %s28, 1
      %p199 = por %p197, %p198
      %p200 = scmp.ne.s32.totalorder %s192, %s195
      %p201 = scmp.eq.s32.totalorder %s28, 0
      %p202 = por %p200, %p201
      %p203 = scmp.ne.s32.totalorder %s192, %s195
      %p204 = scmp.eq.s32.totalorder %s33, 1
      %p205 = por %p203, %p204
      %p206 = scmp.ne.s32.totalorder %s195, %s196
      %p207 = scmp.eq.s32.totalorder %s33, 0
      %p208 = por %p206, %p207
      %p209 = scmp.ne.s32.totalorder %s195, %s196
      %p210 = scmp.eq.s32.totalorder %s34, 1
      %p211 = por %p209, %p210
      %p213 = scmp.ne.s32.totalorder %s196, %s212
      %p214 = scmp.eq.s32.totalorder %s34, 0
      %p215 = por %p213, %p214
      %s216 = ssub.s32 %s35, %s47
      %s217 = ssub.s32 %s36, %s43
      %s218 = sor.u32 %s216, %s217
      %p219 = scmp.eq.s32.totalorder %s218, 0
      %s221 = sadd.s32 %s220, 1
      %s222 = scalar_select %p219, %s220, %s221
      %p225 = pneg %p219
      %p226 = scmp.eq.s32.totalorder %s28, 1
      %p227 = por %p225, %p226
      %p228 = scmp.ne.s32.totalorder %s220, %s223
      %p229 = scmp.eq.s32.totalorder %s28, 0
      %p230 = por %p228, %p229
      %p231 = scmp.ne.s32.totalorder %s220, %s223
      %p232 = scmp.eq.s32.totalorder %s33, 1
      %p233 = por %p231, %p232
      %p234 = scmp.ne.s32.totalorder %s223, %s224
      %p235 = scmp.eq.s32.totalorder %s33, 0
      %p236 = por %p234, %p235
      %p237 = scmp.ne.s32.totalorder %s223, %s224
      %p238 = scmp.eq.s32.totalorder %s34, 1
      %p239 = por %p237, %p238
      %p241 = scmp.ne.s32.totalorder %s224, %s240
      %p242 = scmp.eq.s32.totalorder %s34, 0
      %p243 = por %p241, %p242
      %s244 = ssub.s32 %s35, %s47
      %s245 = ssub.s32 %s36, %s43
      %s246 = sor.u32 %s244, %s245
      %p247 = scmp.eq.s32.totalorder %s246, 0
      %s249 = sadd.s32 %s248, 1
      %s250 = scalar_select %p247, %s248, %s249
      %p253 = pneg %p247
      %p254 = scmp.eq.s32.totalorder %s28, 1
      %p255 = por %p253, %p254
      %p256 = scmp.ne.s32.totalorder %s248, %s251
      %p257 = scmp.eq.s32.totalorder %s28, 0
      %p258 = por %p256, %p257
      %p259 = scmp.ne.s32.totalorder %s248, %s251
      %p260 = scmp.eq.s32.totalorder %s33, 1
      %p261 = por %p259, %p260
      %p262 = scmp.ne.s32.totalorder %s251, %s252
      %p263 = scmp.eq.s32.totalorder %s33, 0
      %p264 = por %p262, %p263
      %p265 = scmp.ne.s32.totalorder %s251, %s252
      %p266 = scmp.eq.s32.totalorder %s34, 1
      %p267 = por %p265, %p266
      %p269 = scmp.ne.s32.totalorder %s252, %s268
      %p270 = scmp.eq.s32.totalorder %s34, 0
      %p271 = por %p269, %p270
      %s272 = ssub.s32 %s35, %s47
      %s273 = ssub.s32 %s36, %s43
      %s274 = sor.u32 %s272, %s273
      %p275 = scmp.eq.s32.totalorder %s274, 0
      %s277 = sadd.s32 %s276, 1
      %s278 = scalar_select %p275, %s276, %s277
      %p281 = pneg %p275
      %p282 = scmp.eq.s32.totalorder %s28, 1
      %p283 = por %p281, %p282
      %p284 = scmp.ne.s32.totalorder %s276, %s279
      %p285 = scmp.eq.s32.totalorder %s28, 0
      %p286 = por %p284, %p285
      %p287 = scmp.ne.s32.totalorder %s276, %s279
      %p288 = scmp.eq.s32.totalorder %s33, 1
      %p289 = por %p287, %p288
      %p290 = scmp.ne.s32.totalorder %s279, %s280
      %p291 = scmp.eq.s32.totalorder %s33, 0
      %p292 = por %p290, %p291
      %p293 = scmp.ne.s32.totalorder %s279, %s280
      %p294 = scmp.eq.s32.totalorder %s34, 1
      %p295 = por %p293, %p294
      %p297 = scmp.ne.s32.totalorder %s280, %s296
      %p298 = scmp.eq.s32.totalorder %s34, 0
      %p299 = por %p297, %p298
      %p300 = scmp.le.s32.totalorder 1, %s28
      %p301 = scmp.lt.s32.totalorder %s28, 3
      %p302 = pnand %p300, %p301
      %p303 = pneg %p302
      // Predicated region
      $region9: #{tpu_custom_call.1} parent=5 // pred_check
        _
      $region10: #{tpu_custom_call.1} parent=5 // pred_check_branch
        %305 = sbr.rel (%p302) target = $region12
      $region11: #{tpu_custom_call.1} parent=5 // pred_region
        %s306 = ssub.s32 %s28, 1
        // Predicated region
        $region13: #{tpu_custom_call.1} parent=11 // pred_check
          %p307 = pneg %p117
        $region14: #{tpu_custom_call.1} parent=11 // pred_check_branch
          %309 = sbr.rel (%p307) target = $region16
        $region15: #{tpu_custom_call.1} parent=11 // pred_region
          _
        $region16: #{tpu_custom_call.1} parent=11 // pred_fallthru
          _
        // Predicated region
        $region17: #{tpu_custom_call.1} parent=11 // pred_check
          %p310 = pneg %p138
        $region18: #{tpu_custom_call.1} parent=11 // pred_check_branch
          %312 = sbr.rel (%p310) target = $region20
        $region19: #{tpu_custom_call.1} parent=11 // pred_region
          _
        $region20: #{tpu_custom_call.1} parent=11 // pred_fallthru
          _
        // Predicated region
        $region21: #{tpu_custom_call.1} parent=11 // pred_check
          %p313 = pneg %p159
        $region22: #{tpu_custom_call.1} parent=11 // pred_check_branch
          %315 = sbr.rel (%p313) target = $region24
        $region23: #{tpu_custom_call.1} parent=11 // pred_region
          _
        $region24: #{tpu_custom_call.1} parent=11 // pred_fallthru
          _
        // Predicated region
        $region25: #{tpu_custom_call.1} parent=11 // pred_check
          %p316 = pneg %p180
        $region26: #{tpu_custom_call.1} parent=11 // pred_check_branch
          %318 = sbr.rel (%p316) target = $region28
        $region27: #{tpu_custom_call.1} parent=11 // pred_region
          _
        $region28: #{tpu_custom_call.1} parent=11 // pred_fallthru
          _
      $region12: #{tpu_custom_call.1} parent=5 // pred_fallthru
        _
      %p319 = scmp.lt.s32.totalorder %s28, 2
      // Predicated region
      $region29: #{tpu_custom_call.1} parent=5 // pred_check
        %p320 = pneg %p319
      $region30: #{tpu_custom_call.1} parent=5 // pred_check_branch
        %322 = sbr.rel (%p320) target = $region32
      $region31: #{tpu_custom_call.1} parent=5 // pred_region
        // Predicated region
        $region33: #{tpu_custom_call.1} parent=31 // pred_check
          %p323 = pneg %p62
        $region34: #{tpu_custom_call.1} parent=31 // pred_check_branch
          %325 = sbr.rel (%p323) target = $region36
        $region35: #{tpu_custom_call.1} parent=31 // pred_region
          %s326 = sand.u32 %s52, 1
          %s327 = scalar_lea.sflag [#allocation3], %s326
          %s328 = sand.u32 %s52, 1
          %s329 = smul.addr %s328, 128
          %s330 = scalar_lea.vmem [#allocation2], %s329
          %s331 = smul.u32 4, %s36
          %333 = vsyncadd %s327, 0
          %s334 = smul.addr %s35, 16
          %s335 = sadd.s32 %s331, %s334
          %s336 = smul.addr %s335, 8
          %s337 = scalar_lea.hbm %s0, %s336
          %s338 = sshll.u32 %s337, 4
          %s339 = int_to_ptr.hbm [resolvable:$true] %s338
          %s340 = sshll.u32 %s330, 4
          %s341 = int_to_ptr.vmem [resolvable:$true] %s340
          %346 = dma.hbm_to_vmem [thread:$0]  %s339, 2048, %s341, %s327, 512, 512, 32
        $region36: #{tpu_custom_call.1} parent=31 // pred_fallthru
          _
        // Predicated region
        $region37: #{tpu_custom_call.1} parent=31 // pred_check
          %p347 = pneg %p90
        $region38: #{tpu_custom_call.1} parent=31 // pred_check_branch
          %349 = sbr.rel (%p347) target = $region40
        $region39: #{tpu_custom_call.1} parent=31 // pred_region
          %s350 = smul.u32 4, %s36
          %p351 = scmp.lt.s32.totalorder %s35, 1
          %s352 = scalar_select %p351, %s35, 1
          %p353 = scmp.lt.s32.totalorder %s350, 3
          %s354 = scalar_select %p353, %s350, 3
          %s355 = smul.addr %s352, 4
          %s356 = sadd.s32 %s354, %s355
          %s357 = smul.addr %s356, 8
          %s358 = scalar_lea.vmem %s1, %s357
          %s359 = smul.u32 4, %s36
        $region40: #{tpu_custom_call.1} parent=31 // pred_fallthru
          _
      $region32: #{tpu_custom_call.1} parent=5 // pred_fallthru
        _
      %p360 = scmp.le.s32.totalorder 1, %s28
      %p361 = scmp.lt.s32.totalorder %s28, 3
      %p362 = pnand %p360, %p361
      %p363 = pneg %p362
      // Predicated region
      $region41: #{tpu_custom_call.1} parent=5 // pred_check
        _
      $region42: #{tpu_custom_call.1} parent=5 // pred_check_branch
        %365 = sbr.rel (%p362) target = $region44
      $region43: #{tpu_custom_call.1} parent=5 // pred_region
        %s366 = ssub.s32 %s28, 1
        %s367 = sand.u32 %s55, 1
        %s368 = scalar_lea.sflag [#allocation3], %s367
        %s369 = sand.u32 %s55, 1
        %s370 = smul.addr %s369, 128
        %s371 = scalar_lea.vmem [#allocation2], %s370
        // Predicated region
        $region45: #{tpu_custom_call.1} parent=43 // pred_check
          %p372 = pneg %p68
        $region46: #{tpu_custom_call.1} parent=43 // pred_check_branch
          %374 = sbr.rel (%p372) target = $region48
        $region47: #{tpu_custom_call.1} parent=43 // pred_region
          %376 = dma.done %s368, 2048
        $region48: #{tpu_custom_call.1} parent=43 // pred_fallthru
          _
        %s377 = sand.u32 %s55, 1
        %s378 = scalar_lea.sflag [#allocation3], %s377
        %s379 = sand.u32 %s55, 1
        %s380 = smul.addr %s379, 128
        %s381 = scalar_lea.vmem [#allocation2], %s380
        %p382 = pneg %p68
        %p383 = pneg %p65
        %s384 = smul.u32 4, %s38
        %p385 = scmp.lt.s32.totalorder %s37, 1
        %s386 = scalar_select %p385, %s37, 1
        %p387 = scmp.lt.s32.totalorder %s384, 3
        %s388 = scalar_select %p387, %s384, 3
        %s389 = smul.addr %s386, 4
        %s390 = sadd.s32 %s388, %s389
        %s391 = smul.addr %s390, 8
        %s392 = scalar_lea.vmem %s1, %s391
        %p393 = pneg %p96
        %p394 = pneg %p93
        %p395 = pneg %p117
        %p396 = pneg %p114
        %p397 = pneg %p138
        %p398 = pneg %p135
        %p399 = pneg %p159
        %p400 = pneg %p156
        %p401 = pneg %p180
        %p402 = pneg %p177
        %p403 = pneg %p208
        %p404 = pneg %p205
        %s405 = sand.u32 %s195, 1
        %s406 = scalar_lea.sflag [#allocation4], %s405
        %s407 = sand.u32 %s195, 1
        %s408 = smul.addr %s407, 32
        %s409 = scalar_lea.vmem [#allocation5], %s408
        %p410 = pneg %p236
        %p411 = pneg %p233
        %s412 = sand.u32 %s33, 1
        %s413 = scalar_lea.sflag [#allocation7], %s412
        %s414 = sand.u32 %s223, 1
        %s415 = smul.addr %s414, 32
        %s416 = scalar_lea.vmem [#allocation6], %s415
        %p417 = pneg %p264
        %p418 = pneg %p261
        %s419 = sand.u32 %s33, 1
        %s420 = scalar_lea.sflag [#allocation7], %s419
        %s421 = sand.u32 %s251, 1
        %s422 = smul.addr %s421, 64
        %s423 = scalar_lea.vmem [#allocation8], %s422
        %p424 = pneg %p292
        %p425 = pneg %p289
        %s426 = sand.u32 %s279, 1
        %s427 = scalar_lea.sflag [#allocation10], %s426
        %s428 = sand.u32 %s279, 1
        %s429 = smul.addr %s428, 32
        %s430 = scalar_lea.vmem [#allocation9], %s429
        %s431 = smul.u32 4, %s38
        %s432 = smul.u32 4, %s38
        %p433 = scmp.lt.s32.totalorder %s37, 1
        %s434 = scalar_select %p433, %s37, 1
        %p435 = scmp.lt.s32.totalorder %s432, 3
        %s436 = scalar_select %p435, %s432, 3
        %s437 = smul.addr %s434, 4
        %s438 = sadd.s32 %s436, %s437
        %s439 = smul.addr %s438, 8
        %s440 = scalar_lea.vmem %s1, %s439
        %s441 = smul.u32 4, %s38
        %s442 = smul.u32 4, %s38
        %s443 = smul.u32 4, %s38
        %s444 = smul.u32 4, %s38
        %s445 = smul.u32 4, %s38
        %v447 = vld [vmem:[%s371] sm:$0xff]
        %v448 = vld [vmem:[%s371 + $0x8] sm:$0xff]
        %v449 = vld [vmem:[%s371 + $0x10] sm:$0xff]
        %v450 = vld [vmem:[%s371 + $0x18] sm:$0xff]
        %v451 = vld [vmem:[%s371 + $0x20] sm:$0xff]
        %v452 = vld [vmem:[%s371 + $0x28] sm:$0xff]
        %v453 = vld [vmem:[%s371 + $0x30] sm:$0xff]
        %v454 = vld [vmem:[%s371 + $0x38] sm:$0xff]
        %v455 = vld [vmem:[%s371 + $0x40] sm:$0xff]
        %v456 = vld [vmem:[%s371 + $0x48] sm:$0xff]
        %v457 = vld [vmem:[%s371 + $0x50] sm:$0xff]
        %v458 = vld [vmem:[%s371 + $0x58] sm:$0xff]
        %v459 = vld [vmem:[%s371 + $0x60] sm:$0xff]
        %v460 = vld [vmem:[%s371 + $0x68] sm:$0xff]
        %v461 = vld [vmem:[%s371 + $0x70] sm:$0xff]
        %v462 = vld [vmem:[%s371 + $0x78] sm:$0xff]
        %v463 = vpack.c.bf16 %v451, %v447
        %v464 = vpack.c.bf16 %v452, %v448
        %v465 = vpack.c.bf16 %v453, %v449
        %v466 = vpack.c.bf16 %v454, %v450
        %v467 = vpack.c.bf16 %v459, %v455
        %v468 = vpack.c.bf16 %v460, %v456
        %v469 = vpack.c.bf16 %v461, %v457
        %v470 = vpack.c.bf16 %v462, %v458
        %v471 = vld [vmem:[%s440] sm:$0xff]
        %v472 = vld [vmem:[%s440 + $0x8] sm:$0xff]
        %v473 = vld [vmem:[%s440 + $0x10] sm:$0xff]
        %v474 = vld [vmem:[%s440 + $0x18] sm:$0xff]
        %v475 = vpack.c.bf16 %v471, %v471
        %v476 = vpack.c.bf16 %v472, %v472
        %v477 = vpack.c.bf16 %v473, %v473
        %v478 = vpack.c.bf16 %v474, %v474
        %v479 = vld [vmem:[%s2] sm:$0xf]
        %v480 = vld [vmem:[%s2 + $0x4] sm:$0xf]
        %v481 = vld [vmem:[%s2 + $0x8] sm:$0xf]
        %v482 = vld [vmem:[%s2 + $0xc] sm:$0xf]
        %v483 = vld [vmem:[%s2 + $0x10] sm:$0xf]
        %v484 = vld [vmem:[%s2 + $0x14] sm:$0xf]
        %v485 = vld [vmem:[%s2 + $0x18] sm:$0xf]
        %v486 = vld [vmem:[%s2 + $0x1c] sm:$0xf]
        %v487 = vld [vmem:[%s3] sm:$0xff]
        %v488 = vld [vmem:[%s3 + $0x8] sm:$0xff]
        %v489 = vld [vmem:[%s3 + $0x10] sm:$0xff]
        %v490 = vld [vmem:[%s3 + $0x18] sm:$0xff]
        %v491 = vld [vmem:[%s3 + $0x20] sm:$0xff]
        %v492 = vld [vmem:[%s3 + $0x28] sm:$0xff]
        %v493 = vld [vmem:[%s3 + $0x30] sm:$0xff]
        %v494 = vld [vmem:[%s3 + $0x38] sm:$0xff]
        %496 = vset.pattern.permute.xlu0 0
        %497 = vperm.xlu0 %496, %v487
        %v498 = vpop.permute.xlu0 %497
        %501 = vset.pattern.permute.xlu0 0
        %502 = vperm.xlu0 %501, %v488
        %v503 = vpop.permute.xlu0 %502
        %506 = vset.pattern.permute.xlu0 0
        %507 = vperm.xlu0 %506, %v489
        %v508 = vpop.permute.xlu0 %507
        %511 = vset.pattern.permute.xlu0 0
        %512 = vperm.xlu0 %511, %v490
        %v513 = vpop.permute.xlu0 %512
        %516 = vset.pattern.permute.xlu0 0
        %517 = vperm.xlu0 %516, %v491
        %v518 = vpop.permute.xlu0 %517
        %521 = vset.pattern.permute.xlu0 0
        %522 = vperm.xlu0 %521, %v492
        %v523 = vpop.permute.xlu0 %522
        %526 = vset.pattern.permute.xlu0 0
        %527 = vperm.xlu0 %526, %v493
        %v528 = vpop.permute.xlu0 %527
        %531 = vset.pattern.permute.xlu0 0
        %532 = vperm.xlu0 %531, %v494
        %v533 = vpop.permute.xlu0 %532
        %v543 = vunpack.c.l.b16 %v479
        %v544 = vunpack.c.l.b16 %v480
        %v545 = vunpack.c.l.b16 %v481
        %v546 = vunpack.c.l.b16 %v482
        %v547 = vunpack.c.l.b16 %v483
        %v548 = vunpack.c.l.b16 %v484
        %v549 = vunpack.c.l.b16 %v485
        %v550 = vunpack.c.l.b16 %v486
        %v551 = vpack.c.b16 %v544, %v543
        %v552 = vpack.c.b16 %v546, %v545
        %v553 = vpack.c.b16 %v548, %v547
        %v554 = vpack.c.b16 %v550, %v549
        %vm555 = vcmask 261120
        %v557 = vsel %vm555, %v551, 0
        %v560 = vsel %vm555, %v552, 0
        %v563 = vsel %vm555, %v553, 0
        %v566 = vsel %vm555, %v554, 0
        %568 = vmatpush.bf16.msra.mxu0 0
        %569 = vmatpush.bf16.msra.mxu0 0
        %570 = vmatpush.bf16.msra.mxu0 0
        %571 = vmatpush.bf16.msra.mxu0 0
        %572 = vmatpush.bf16.msra.mxu0 0
        %573 = vmatpush.bf16.msra.mxu0 0
        %574 = vmatpush.bf16.msra.mxu0 %v467
        %575 = vmatpush.bf16.msra.mxu0 %v463
        %576 = vmatmul.bf16.gmra.mxu0 %v557
        %v577 = vpop.f32.mrf.mxu0
        %v578 = vadd.f32 %v498, %v577
        %v579 = vpop.f32.mrf.mxu0
        %v580 = vadd.f32 %v503, %v579
        %581 = vmatmul.bf16.gmra.mxu0 %v560
        %v582 = vpop.f32.mrf.mxu0
        %v583 = vadd.f32 %v508, %v582
        %v584 = vpop.f32.mrf.mxu0
        %v585 = vadd.f32 %v513, %v584
        %586 = vmatmul.bf16.gmra.mxu0 %v563
        %v587 = vpop.f32.mrf.mxu0
        %v588 = vadd.f32 %v518, %v587
        %v589 = vpop.f32.mrf.mxu0
        %v590 = vadd.f32 %v523, %v589
        %591 = vmatmul.bf16.gmra.mxu0 %v566
        %v592 = vpop.f32.mrf.mxu0
        %v593 = vadd.f32 %v528, %v592
        %v594 = vpop.f32.mrf.mxu0
        %v595 = vadd.f32 %v533, %v594
        %596 = vdwg.mxu0
        %597 = vmatpush.bf16.msra.mxu0 0
        %598 = vmatpush.bf16.msra.mxu0 0
        %599 = vmatpush.bf16.msra.mxu0 0
        %600 = vmatpush.bf16.msra.mxu0 0
        %601 = vmatpush.bf16.msra.mxu0 0
        %602 = vmatpush.bf16.msra.mxu0 0
        %603 = vmatpush.bf16.msra.mxu0 %v468
        %604 = vmatpush.bf16.msra.mxu0 %v464
        %605 = vmatmul.bf16.gmra.mxu0 %v557
        %v606 = vpop.f32.mrf.mxu0
        %v607 = vadd.f32 %v498, %v606
        %v608 = vpop.f32.mrf.mxu0
        %v609 = vadd.f32 %v503, %v608
        %610 = vmatmul.bf16.gmra.mxu0 %v560
        %v611 = vpop.f32.mrf.mxu0
        %v612 = vadd.f32 %v508, %v611
        %v613 = vpop.f32.mrf.mxu0
        %v614 = vadd.f32 %v513, %v613
        %615 = vmatmul.bf16.gmra.mxu0 %v563
        %v616 = vpop.f32.mrf.mxu0
        %v617 = vadd.f32 %v518, %v616
        %v618 = vpop.f32.mrf.mxu0
        %v619 = vadd.f32 %v523, %v618
        %620 = vmatmul.bf16.gmra.mxu0 %v566
        %v621 = vpop.f32.mrf.mxu0
        %v622 = vadd.f32 %v528, %v621
        %v623 = vpop.f32.mrf.mxu0
        %v624 = vadd.f32 %v533, %v623
        %625 = vdwg.mxu0
        %626 = vmatpush.bf16.msra.mxu0 0
        %627 = vmatpush.bf16.msra.mxu0 0
        %628 = vmatpush.bf16.msra.mxu0 0
        %629 = vmatpush.bf16.msra.mxu0 0
        %630 = vmatpush.bf16.msra.mxu0 0
        %631 = vmatpush.bf16.msra.mxu0 0
        %632 = vmatpush.bf16.msra.mxu0 %v469
        %633 = vmatpush.bf16.msra.mxu0 %v465
        %634 = vmatmul.bf16.gmra.mxu0 %v557
        %v635 = vpop.f32.mrf.mxu0
        %v636 = vadd.f32 %v498, %v635
        %v637 = vpop.f32.mrf.mxu0
        %v638 = vadd.f32 %v503, %v637
        %639 = vmatmul.bf16.gmra.mxu0 %v560
        %v640 = vpop.f32.mrf.mxu0
        %v641 = vadd.f32 %v508, %v640
        %v642 = vpop.f32.mrf.mxu0
        %v643 = vadd.f32 %v513, %v642
        %644 = vmatmul.bf16.gmra.mxu0 %v563
        %v645 = vpop.f32.mrf.mxu0
        %v646 = vadd.f32 %v518, %v645
        %v647 = vpop.f32.mrf.mxu0
        %v648 = vadd.f32 %v523, %v647
        %649 = vmatmul.bf16.gmra.mxu0 %v566
        %v650 = vpop.f32.mrf.mxu0
        %v651 = vadd.f32 %v528, %v650
        %v652 = vpop.f32.mrf.mxu0
        %v653 = vadd.f32 %v533, %v652
        %654 = vdwg.mxu0
        %655 = vmatpush.bf16.msra.mxu0 0
        %656 = vmatpush.bf16.msra.mxu0 0
        %657 = vmatpush.bf16.msra.mxu0 0
        %658 = vmatpush.bf16.msra.mxu0 0
        %659 = vmatpush.bf16.msra.mxu0 0
        %660 = vmatpush.bf16.msra.mxu0 0
        %661 = vmatpush.bf16.msra.mxu0 %v470
        %662 = vmatpush.bf16.msra.mxu0 %v466
        %663 = vmatmul.bf16.gmra.mxu0 %v557
        %v664 = vpop.f32.mrf.mxu0
        %v665 = vadd.f32 %v498, %v664
        %v666 = vpop.f32.mrf.mxu0
        %v667 = vadd.f32 %v503, %v666
        %668 = vmatmul.bf16.gmra.mxu0 %v560
        %v669 = vpop.f32.mrf.mxu0
        %v670 = vadd.f32 %v508, %v669
        %v671 = vpop.f32.mrf.mxu0
        %v672 = vadd.f32 %v513, %v671
        %673 = vmatmul.bf16.gmra.mxu0 %v563
        %v674 = vpop.f32.mrf.mxu0
        %v675 = vadd.f32 %v518, %v674
        %v676 = vpop.f32.mrf.mxu0
        %v677 = vadd.f32 %v523, %v676
        %678 = vmatmul.bf16.gmra.mxu0 %v566
        %v679 = vpop.f32.mrf.mxu0
        %v680 = vadd.f32 %v528, %v679
        %v681 = vpop.f32.mrf.mxu0
        %v682 = vadd.f32 %v533, %v681
        %683 = vdwg.mxu0
        %v684 = vld [vmem:[%s4] sm:$0xf]
        %v685 = vld [vmem:[%s4 + $0x4] sm:$0xf]
        %v686 = vld [vmem:[%s5] sm:$0xff]
        %v687 = vld [vmem:[%s5 + $0x8] sm:$0xff]
        %689 = vset.pattern.permute.xlu0 0
        %690 = vperm.xlu0 %689, %v686
        %v691 = vpop.permute.xlu0 %690
        %694 = vset.pattern.permute.xlu0 0
        %695 = vperm.xlu0 %694, %v687
        %v696 = vpop.permute.xlu0 %695
        %v700 = vunpack.c.l.b16 %v684
        %v701 = vunpack.c.l.b16 %v685
        %v702 = vpack.c.b16 %v701, %v700
        %vm703 = vcmask 64512
        %v705 = vsel %vm703, %v702, 0
        %vm707 = vcmask 1043456
        %v709 = vsel %vm707, %v475, 0
        %v712 = vsel %vm707, %v476, 0
        %v715 = vsel %vm707, %v477, 0
        %v718 = vsel %vm707, %v478, 0
        %720 = vmatpush.bf16.msra.mxu0 0
        %721 = vmatpush.bf16.msra.mxu0 0
        %722 = vmatpush.bf16.msra.mxu0 0
        %723 = vmatpush.bf16.msra.mxu0 0
        %724 = vmatpush.bf16.msra.mxu0 0
        %725 = vmatpush.bf16.msra.mxu0 0
        %726 = vmatpush.bf16.msra.mxu0 0
        %727 = vmatpush.bf16.msra.mxu0 %v709
        %728 = vmatmul.bf16.gmra.mxu0 %v705
        %v729 = vpop.f32.mrf.mxu0
        %v730 = vadd.f32 %v691, %v729
        %v731 = vpop.f32.mrf.mxu0
        %v732 = vadd.f32 %v696, %v731
        %733 = vdwg.mxu0
        %734 = vmatpush.bf16.msra.mxu0 0
        %735 = vmatpush.bf16.msra.mxu0 0
        %736 = vmatpush.bf16.msra.mxu0 0
        %737 = vmatpush.bf16.msra.mxu0 0
        %738 = vmatpush.bf16.msra.mxu0 0
        %739 = vmatpush.bf16.msra.mxu0 0
        %740 = vmatpush.bf16.msra.mxu0 0
        %741 = vmatpush.bf16.msra.mxu0 %v712
        %742 = vmatmul.bf16.gmra.mxu0 %v705
        %v743 = vpop.f32.mrf.mxu0
        %v744 = vadd.f32 %v691, %v743
        %v745 = vpop.f32.mrf.mxu0
        %v746 = vadd.f32 %v696, %v745
        %747 = vdwg.mxu0
        %748 = vmatpush.bf16.msra.mxu0 0
        %749 = vmatpush.bf16.msra.mxu0 0
        %750 = vmatpush.bf16.msra.mxu0 0
        %751 = vmatpush.bf16.msra.mxu0 0
        %752 = vmatpush.bf16.msra.mxu0 0
        %753 = vmatpush.bf16.msra.mxu0 0
        %754 = vmatpush.bf16.msra.mxu0 0
        %755 = vmatpush.bf16.msra.mxu0 %v715
        %756 = vmatmul.bf16.gmra.mxu0 %v705
        %v757 = vpop.f32.mrf.mxu0
        %v758 = vadd.f32 %v691, %v757
        %v759 = vpop.f32.mrf.mxu0
        %v760 = vadd.f32 %v696, %v759
        %761 = vdwg.mxu0
        %762 = vmatpush.bf16.msra.mxu0 0
        %763 = vmatpush.bf16.msra.mxu0 0
        %764 = vmatpush.bf16.msra.mxu0 0
        %765 = vmatpush.bf16.msra.mxu0 0
        %766 = vmatpush.bf16.msra.mxu0 0
        %767 = vmatpush.bf16.msra.mxu0 0
        %768 = vmatpush.bf16.msra.mxu0 0
        %769 = vmatpush.bf16.msra.mxu0 %v718
        %770 = vmatmul.bf16.gmra.mxu0 %v705
        %v771 = vpop.f32.mrf.mxu0
        %v772 = vadd.f32 %v691, %v771
        %v773 = vpop.f32.mrf.mxu0
        %v774 = vadd.f32 %v696, %v773
        %775 = vdwg.mxu0
        %v776 = vpack.c.bf16 %v607, %v578
        %v777 = vpack.c.bf16 %v665, %v636
        %v778 = vpack.c.bf16 %v609, %v580
        %v779 = vpack.c.bf16 %v667, %v638
        %780 = vst [vmem:[%s409] sm:$0xff] %v776
        %781 = vst [vmem:[%s409 + $0x8] sm:$0xff] %v777
        %782 = vst [vmem:[%s409 + $0x10] sm:$0xff] %v778
        %783 = vst [vmem:[%s409 + $0x18] sm:$0xff] %v779
        %v784 = vpack.c.bf16 %v612, %v583
        %v785 = vpack.c.bf16 %v670, %v641
        %v786 = vpack.c.bf16 %v614, %v585
        %v787 = vpack.c.bf16 %v672, %v643
        %788 = vst [vmem:[%s416] sm:$0xff] %v784
        %789 = vst [vmem:[%s416 + $0x8] sm:$0xff] %v785
        %790 = vst [vmem:[%s416 + $0x10] sm:$0xff] %v786
        %791 = vst [vmem:[%s416 + $0x18] sm:$0xff] %v787
        %v792 = vpack.c.bf16 %v617, %v588
        %v793 = vpack.c.bf16 %v675, %v646
        %v794 = vpack.c.bf16 %v619, %v590
        %v795 = vpack.c.bf16 %v677, %v648
        %v796 = vpack.c.bf16 %v622, %v593
        %v797 = vpack.c.bf16 %v680, %v651
        %v798 = vpack.c.bf16 %v624, %v595
        %v799 = vpack.c.bf16 %v682, %v653
        %800 = vst [vmem:[%s423] sm:$0xff] %v792
        %801 = vst [vmem:[%s423 + $0x8] sm:$0xff] %v793
        %802 = vst [vmem:[%s423 + $0x10] sm:$0xff] %v794
        %803 = vst [vmem:[%s423 + $0x18] sm:$0xff] %v795
        %804 = vst [vmem:[%s423 + $0x20] sm:$0xff] %v796
        %805 = vst [vmem:[%s423 + $0x28] sm:$0xff] %v797
        %806 = vst [vmem:[%s423 + $0x30] sm:$0xff] %v798
        %807 = vst [vmem:[%s423 + $0x38] sm:$0xff] %v799
        %v808 = vpack.c.bf16 %v744, %v730
        %v809 = vpack.c.bf16 %v772, %v758
        %v810 = vpack.c.bf16 %v746, %v732
        %v811 = vpack.c.bf16 %v774, %v760
        %812 = vst [vmem:[%s430] sm:$0xff] %v808
        %813 = vst [vmem:[%s430 + $0x8] sm:$0xff] %v809
        %814 = vst [vmem:[%s430 + $0x10] sm:$0xff] %v810
        %815 = vst [vmem:[%s430 + $0x18] sm:$0xff] %v811
        %s816 = sand.u32 %s195, 1
        %s817 = scalar_lea.sflag [#allocation4], %s816
        %s818 = sand.u32 %s195, 1
        %s819 = smul.addr %s818, 32
        %s820 = scalar_lea.vmem [#allocation5], %s819
        %s821 = sand.u32 %s33, 1
        %s822 = scalar_lea.sflag [#allocation7], %s821
        %s823 = sand.u32 %s223, 1
        %s824 = smul.addr %s823, 32
        %s825 = scalar_lea.vmem [#allocation6], %s824
        %s826 = sand.u32 %s33, 1
        %s827 = scalar_lea.sflag [#allocation7], %s826
        %s828 = sand.u32 %s251, 1
        %s829 = smul.addr %s828, 64
        %s830 = scalar_lea.vmem [#allocation8], %s829
        %s831 = sand.u32 %s279, 1
        %s832 = scalar_lea.sflag [#allocation10], %s831
        %s833 = sand.u32 %s279, 1
        %s834 = smul.addr %s833, 32
        %s835 = scalar_lea.vmem [#allocation9], %s834
        // Predicated region
        $region49: #{tpu_custom_call.1} parent=43 // pred_check
          %p836 = pneg %p205
        $region50: #{tpu_custom_call.1} parent=43 // pred_check_branch
          %838 = sbr.rel (%p836) target = $region52
        $region51: #{tpu_custom_call.1} parent=43 // pred_region
          %s839 = smul.u32 4, %s38
          %841 = vsyncadd %s817, 0
          %s842 = smul.addr %s37, 8
          %s843 = sadd.s32 %s839, %s842
          %s844 = smul.addr %s843, 4
          %s845 = scalar_lea.hbm %s6, %s844
          %s846 = sshll.u32 %s820, 4
          %s847 = int_to_ptr.vmem [resolvable:$true] %s846
          %s848 = sshll.u32 %s845, 4
          %s849 = int_to_ptr.hbm [resolvable:$true] %s848
          %854 = dma.vmem_to_hbm [thread:$0]  %s847, 512, %s849, %s817, 256, 256, 16
        $region52: #{tpu_custom_call.1} parent=43 // pred_fallthru
          _
        // Predicated region
        $region53: #{tpu_custom_call.1} parent=43 // pred_check
          %p855 = pneg %p233
        $region54: #{tpu_custom_call.1} parent=43 // pred_check_branch
          %857 = sbr.rel (%p855) target = $region56
        $region55: #{tpu_custom_call.1} parent=43 // pred_region
          %s858 = smul.u32 4, %s38
          %860 = vsyncadd %s822, 0
          %s861 = smul.addr %s37, 8
          %s862 = sadd.s32 %s858, %s861
          %s863 = smul.addr %s862, 4
          %s864 = scalar_lea.hbm %s7, %s863
          %s865 = sshll.u32 %s825, 4
          %s866 = int_to_ptr.vmem [resolvable:$true] %s865
          %s867 = sshll.u32 %s864, 4
          %s868 = int_to_ptr.hbm [resolvable:$true] %s867
          %873 = dma.vmem_to_hbm [thread:$0]  %s866, 512, %s868, %s822, 256, 256, 16
        $region56: #{tpu_custom_call.1} parent=43 // pred_fallthru
          _
        // Predicated region
        $region57: #{tpu_custom_call.1} parent=43 // pred_check
          %p874 = pneg %p261
        $region58: #{tpu_custom_call.1} parent=43 // pred_check_branch
          %876 = sbr.rel (%p874) target = $region60
        $region59: #{tpu_custom_call.1} parent=43 // pred_region
          %s877 = smul.u32 4, %s38
          %879 = vsyncadd %s827, 0
          %s880 = smul.addr %s37, 16
          %s881 = sadd.s32 %s877, %s880
          %s882 = smul.addr %s881, 4
          %s883 = scalar_lea.hbm %s8, %s882
          %s884 = sshll.u32 %s830, 4
          %s885 = int_to_ptr.vmem [resolvable:$true] %s884
          %s886 = sshll.u32 %s883, 4
          %s887 = int_to_ptr.hbm [resolvable:$true] %s886
          %892 = dma.vmem_to_hbm [thread:$0]  %s885, 1024, %s887, %s827, 256, 256, 16
        $region60: #{tpu_custom_call.1} parent=43 // pred_fallthru
          _
        // Predicated region
        $region61: #{tpu_custom_call.1} parent=43 // pred_check
          %p893 = pneg %p289
        $region62: #{tpu_custom_call.1} parent=43 // pred_check_branch
          %895 = sbr.rel (%p893) target = $region64
        $region63: #{tpu_custom_call.1} parent=43 // pred_region
          %s896 = smul.u32 4, %s38
          %898 = vsyncadd %s832, 0
          %s899 = smul.addr %s37, 8
          %s900 = sadd.s32 %s896, %s899
          %s901 = smul.addr %s900, 4
          %s902 = scalar_lea.hbm %s9, %s901
          %s903 = sshll.u32 %s835, 4
          %s904 = int_to_ptr.vmem [resolvable:$true] %s903
          %s905 = sshll.u32 %s902, 4
          %s906 = int_to_ptr.hbm [resolvable:$true] %s905
          %911 = dma.vmem_to_hbm [thread:$0]  %s904, 512, %s906, %s832, 256, 256, 16
        $region64: #{tpu_custom_call.1} parent=43 // pred_fallthru
          _
      $region44: #{tpu_custom_call.1} parent=5 // pred_fallthru
        _
      %p912 = scmp.le.s32.totalorder 2, %s28
      // Predicated region
      $region65: #{tpu_custom_call.1} parent=5 // pred_check
        %p913 = pneg %p912
      $region66: #{tpu_custom_call.1} parent=5 // pred_check_branch
        %915 = sbr.rel (%p913) target = $region68
      $region67: #{tpu_custom_call.1} parent=5 // pred_region
        %s916 = ssub.s32 %s28, 2
        // Predicated region
        $region69: #{tpu_custom_call.1} parent=67 // pred_check
          %p917 = pneg %p211
        $region70: #{tpu_custom_call.1} parent=67 // pred_check_branch
          %919 = sbr.rel (%p917) target = $region72
        $region71: #{tpu_custom_call.1} parent=67 // pred_region
          %s920 = sand.u32 %s196, 1
          %s921 = scalar_lea.sflag [#allocation4], %s920
          %s922 = sand.u32 %s196, 1
          %s923 = smul.addr %s922, 32
          %s924 = scalar_lea.vmem [#allocation5], %s923
          %926 = dma.done %s921, 512
        $region72: #{tpu_custom_call.1} parent=67 // pred_fallthru
          _
        // Predicated region
        $region73: #{tpu_custom_call.1} parent=67 // pred_check
          %p927 = pneg %p239
        $region74: #{tpu_custom_call.1} parent=67 // pred_check_branch
          %929 = sbr.rel (%p927) target = $region76
        $region75: #{tpu_custom_call.1} parent=67 // pred_region
          %s930 = sand.u32 %s34, 1
          %s931 = scalar_lea.sflag [#allocation7], %s930
          %s932 = sand.u32 %s224, 1
          %s933 = smul.addr %s932, 32
          %s934 = scalar_lea.vmem [#allocation6], %s933
          %936 = dma.done %s931, 512
        $region76: #{tpu_custom_call.1} parent=67 // pred_fallthru
          _
        // Predicated region
        $region77: #{tpu_custom_call.1} parent=67 // pred_check
          %p937 = pneg %p267
        $region78: #{tpu_custom_call.1} parent=67 // pred_check_branch
          %939 = sbr.rel (%p937) target = $region80
        $region79: #{tpu_custom_call.1} parent=67 // pred_region
          %s940 = sand.u32 %s34, 1
          %s941 = scalar_lea.sflag [#allocation7], %s940
          %s942 = sand.u32 %s252, 1
          %s943 = smul.addr %s942, 64
          %s944 = scalar_lea.vmem [#allocation8], %s943
          %946 = dma.done %s941, 1024
        $region80: #{tpu_custom_call.1} parent=67 // pred_fallthru
          _
        // Predicated region
        $region81: #{tpu_custom_call.1} parent=67 // pred_check
          %p947 = pneg %p295
        $region82: #{tpu_custom_call.1} parent=67 // pred_check_branch
          %949 = sbr.rel (%p947) target = $region84
        $region83: #{tpu_custom_call.1} parent=67 // pred_region
          %s950 = sand.u32 %s280, 1
          %s951 = scalar_lea.sflag [#allocation10], %s950
          %s952 = sand.u32 %s280, 1
          %s953 = smul.addr %s952, 32
          %s954 = scalar_lea.vmem [#allocation9], %s953
          %956 = dma.done %s951, 512
        $region84: #{tpu_custom_call.1} parent=67 // pred_fallthru
          _
      $region68: #{tpu_custom_call.1} parent=5 // pred_fallthru
        _
    $region6: #{tpu_custom_call.1} parent=1 // loop_footer
      %s32 = sadd.s32 1, %s28
    $region7: #{tpu_custom_call.1} parent=1 // loop_footer_branch
      %27 = sbr.rel target = $region3
    $region8: #{tpu_custom_call.1} parent=1 // loop_exit
      _
    %957 = vsyncpa [#allocation3], 1
    %s958 = scalar_lea.sflag [#allocation3], 1
    %959 = vsyncpa %s958, 1
    %960 = vsyncpa [#allocation4], 1
    %s961 = scalar_lea.sflag [#allocation4], 1
    %962 = vsyncpa %s961, 1
    %963 = vsyncpa [#allocation7], 1
    %s964 = scalar_lea.sflag [#allocation7], 1
    %965 = vsyncpa %s964, 1
    %966 = vsyncpa [#allocation10], 1
    %s967 = scalar_lea.sflag [#allocation10], 1
    %968 = vsyncpa %s967, 1

</llo_original>
